<compile_context>
chip_gen: v5e
topology: v5e:2x2
jax: 0.10.0
libtpu: 0.0.40
codegen_flags: <defaults>
</compile_context>

<pallas_src>
import functools

import numpy as np

import jax
import jax.numpy as jnp
from jax.experimental import pallas as pl
from jax.experimental.pallas import tpu as pltpu


def fusion_kernel(xt_ref, w1t_ref, b1_ref, w2t_ref, b2_ref, tapw_ref, out_ref,
                  *, n_taps, pad, mxu_dtype, approximate_gelu):
    """One grid step: TB whole batches in channels-on-lanes layout (L, TB*C)."""
    # projector MLP over the feature axis (biases broadcast once per block)
    ht = jnp.dot(w1t_ref[...], xt_ref[...],
                 preferred_element_type=jnp.float32) + b1_ref[...]        # (H, TB*C)
    ht = jax.nn.gelu(ht, approximate=approximate_gelu)
    if mxu_dtype is not None:
        ht = ht.astype(mxu_dtype)            # bf16 MXU inputs; f32 accumulation kept
    zt = jnp.dot(w2t_ref[...], ht,
                 preferred_element_type=jnp.float32) + b2_ref[...]        # (L_out, TB*C)

    # ECA: global average pool over L_out (sublane reduce), then the k-tap channel conv
    # as k in-register lane rotations.  tapw = conv_w[j] * per-lane validity mask, so
    # Conv1d zero padding, batch boundaries and the cyclic wrap are already zeroed --
    # no VMEM pool scratch / masked stores / unaligned loads.
    tbc = zt.shape[1]
    y = jnp.mean(zt, axis=0, keepdims=True)                               # (1, TB*C)
    acc = jnp.zeros_like(y)
    for j in range(n_taps):                  # static unroll; K is tiny (e.g. 3)
        s = (pad - j) % tbc                  # lane p sees y[p + j - pad]
        ys = y if s == 0 else pltpu.roll(y, shift=s, axis=1)
        acc = acc + tapw_ref[pl.ds(j, 1), :] * ys
    gate = jax.nn.sigmoid(acc)                                            # (1, TB*C)

    out_ref[...] = (zt * gate).astype(out_ref.dtype)  # gate broadcasts over sublanes


def _vmem_budget_bytes():
    """Per-generation VMEM budget for tile sizing (and vmem_limit_bytes)."""
    try:
        kind = jax.devices()[0].device_kind.lower()
    except Exception:  # pragma: no cover - defensive
        kind = ""
    if "v7" in kind or "7x" in kind:
        return 48 * 1024 * 1024              # v7x: 64 MiB per TensorCore
    if "v2" in kind or "v3" in kind:
        return 12 * 1024 * 1024
    if "v4" in kind or "v5" in kind or "v6" in kind:
        return 96 * 1024 * 1024              # 128 MiB physical VMEM
    return 64 * 1024 * 1024


def _pick_tb(batch, channels, *, l_in, hidden, l_out, in_itemsize, out_itemsize,
             vmem_budget, lane_cap=2048):
    """Batches folded per grid step.

    Lane rule: TB*C must be a multiple of 128 or span the full B*C extent.
    Sizing: largest lane-dense block whose pipeline footprint (double-buffered
    activation in/out + f32 intermediates + weights) fits ~60% of the VMEM budget,
    capped at lane_cap lanes.  Balance: among near-max candidates prefer one giving
    an even grid-step count >= 2 so the 'parallel' axis splits evenly across v7x's
    two TensorCores (harmless on single-TC v5e/v6e).
    """
    def lane_ok(d):
        return d == batch or (d * channels) % 128 == 0

    def footprint(d):
        tbc = d * channels
        act = 2 * l_in * tbc * in_itemsize + 2 * l_out * tbc * out_itemsize
        inter = (hidden + l_out + 8) * tbc * 4                 # ht, zt, gate (f32)
        weights = (hidden * l_in + l_out * hidden) * in_itemsize + (hidden + l_out) * 4
        return act + inter + weights

    divisors = [d for d in range(1, batch + 1) if batch % d == 0 and lane_ok(d)]
    fitting = [d for d in divisors
               if d * channels <= lane_cap and 10 * footprint(d) <= 6 * vmem_budget]
    if not fitting:
        return min(divisors)
    best = max(fitting)
    balanced = [d for d in fitting
                if (batch // d) >= 2 and (batch // d) % 2 == 0 and 2 * d >= best]
    return max(balanced) if balanced else best


def fusion_forward(img_feats, text_feats, w1, b1, w2, b2, conv_w, *,
                   mxu_dtype=None, out_dtype=jnp.float32, approximate_gelu=True):
    B, C_img, L = img_feats.shape
    C = C_img + text_feats.shape[1]
    H = w1.shape[1]
    L_out = w2.shape[1]
    K = conv_w.shape[0]
    assert K % 2 == 1, "ECA k_size must be odd (torch Conv1d 'same' padding semantics)"
    pad = (K - 1) // 2

    act_dtype = mxu_dtype if mxu_dtype is not None else jnp.float32
    in_itemsize = jnp.dtype(act_dtype).itemsize
    out_itemsize = jnp.dtype(out_dtype).itemsize
    vmem_budget = _vmem_budget_bytes()
    TB = _pick_tb(B, C, l_in=L, hidden=H, l_out=L_out,
                  in_itemsize=in_itemsize, out_itemsize=out_itemsize,
                  vmem_budget=vmem_budget)
    TBC = TB * C
    n_blocks = B // TB

    # ---- wrapper-side layout glue (plain XLA, done once) ----
    x = jnp.concatenate([img_feats, text_feats], axis=1)              # (B, C, L)
    xt = x.transpose(2, 0, 1).reshape(L, B * C).astype(act_dtype)     # col b*C + c == x[b,c,:]
    w1t = w1.T.astype(act_dtype)                                      # (H, L)
    w2t = w2.T.astype(act_dtype)                                      # (L_out, H)
    b1c = b1.reshape(H, 1).astype(jnp.float32)
    b2c = b2.reshape(L_out, 1).astype(jnp.float32)

    # ECA conv taps folded with a static per-lane validity mask (implements Conv1d zero
    # padding, prevents cross-batch mixing within a block, and zeroes cyclic roll wrap).
    c_idx = np.arange(TBC) % C
    masks = np.stack(
        [((c_idx + (j - pad) >= 0) & (c_idx + (j - pad) < C)).astype(np.float32)
         for j in range(K)], axis=0)                                  # (K, TB*C), static
    tapw = conv_w.reshape(K, 1).astype(jnp.float32) * jnp.asarray(masks)

    kernel = functools.partial(fusion_kernel, n_taps=K, pad=pad,
                               mxu_dtype=mxu_dtype, approximate_gelu=approximate_gelu)
    const = dict(pipeline_mode=pl.Buffered(1))   # constant index_map -> single buffer

    grid_spec = pltpu.PrefetchScalarGridSpec(
        num_scalar_prefetch=0,
        grid=(n_blocks,),
        in_specs=[
            pl.BlockSpec((L, TBC), lambda i: (0, i)),                 # activations
            pl.BlockSpec((H, L), lambda i: (0, 0), **const),          # W1^T
            pl.BlockSpec((H, 1), lambda i: (0, 0), **const),          # b1
            pl.BlockSpec((L_out, H), lambda i: (0, 0), **const),      # W2^T
            pl.BlockSpec((L_out, 1), lambda i: (0, 0), **const),      # b2
            pl.BlockSpec((K, TBC), lambda i: (0, 0), **const),        # ECA taps * mask
        ],
        out_specs=pl.BlockSpec((L_out, TBC), lambda i: (0, i)),
    )

    cost = pl.CostEstimate(
        flops=2 * B * C * (L * H + H * L_out),
        transcendentals=B * C * (H + 1),
        bytes_accessed=(L * B * C * in_itemsize
                        + L_out * B * C * out_itemsize
                        + (H * L + L_out * H) * in_itemsize
                        + (H + L_out + K * TBC) * 4),
    )

    out_t = pl.pallas_call(
        kernel,
        out_shape=jax.ShapeDtypeStruct((L_out, B * C), out_dtype),
        grid_spec=grid_spec,
        cost_estimate=cost,
        compiler_params=pltpu.CompilerParams(
            dimension_semantics=("parallel",),
            vmem_limit_bytes=vmem_budget,
        ),
    )(xt, w1t, b1c, w2t, b2c, tapw)

    return out_t.reshape(L_out, B, C).transpose(1, 2, 0)              # (B, C, L_out)


def fusion_reference(img, txt, w1, b1, w2, b2, conv_w, *, approximate_gelu=True):
    """Pure-JAX reference of the same forward pass (torch layout/semantics)."""
    x = jnp.concatenate([img, txt], axis=1)                           # (B, C, L)
    h = jax.nn.gelu(jnp.einsum("bcl,lh->bch", x, w1, precision="highest") + b1,
                    approximate=approximate_gelu)
    z = jnp.einsum("bch,ho->bco", h, w2, precision="highest") + b2    # (B, C, L_out)
    y = jnp.mean(z, axis=-1)                                          # (B, C)
    k = conv_w.shape[0]
    pad = (k - 1) // 2
    yp = jnp.pad(y, ((0, 0), (pad, pad)))                             # Conv1d zero padding
    g = sum(conv_w[j] * yp[:, j:j + y.shape[1]] for j in range(k))
    return z * jax.nn.sigmoid(g)[..., None]


if __name__ == "__main__":
    # small config: dim_in (ECA channels) = C_img + C_txt = 32, k_size = 3.
    # B*C = 256 -> lane-dense 128-wide blocks and a 2-step grid get exercised.
    B, C_img, C_txt, L, H, L_out, K = 8, 16, 16, 32, 64, 32, 3

    key = jax.random.PRNGKey(0)
    k_img, k_txt, k_w1, k_b1, k_w2, k_b2, k_cw = jax.random.split(key, 7)

    img_feats = jax.random.normal(k_img, (B, C_img, L), jnp.float32)
    text_feats = jax.random.normal(k_txt, (B, C_txt, L), jnp.float32)

    # deterministic synthetic parameters (projector MLP + ECA conv1d weight)
    w1 = jax.random.normal(k_w1, (L, H), jnp.float32) * (1.0 / jnp.sqrt(L))
    b1 = jax.random.normal(k_b1, (H,), jnp.float32) * 0.02
    w2 = jax.random.normal(k_w2, (H, L_out), jnp.float32) * (1.0 / jnp.sqrt(H))
    b2 = jax.random.normal(k_b2, (L_out,), jnp.float32) * 0.02
    conv_w = jax.random.normal(k_cw, (K,), jnp.float32) * 0.5         # Conv1d(1,1,k,bias=False)

    out = fusion_forward(img_feats, text_feats, w1, b1, w2, b2, conv_w)
    out = jax.block_until_ready(out)

    ref = fusion_reference(img_feats, text_feats, w1, b1, w2, b2, conv_w)
    assert out.shape == (B, C_img + C_txt, L_out)
    assert jnp.allclose(out, ref, atol=1e-4, rtol=1e-4), "mismatch vs reference"

    print("KERNEL_OK")
</pallas_src>

<mosaic_0001>
module attributes {stable_mosaic.version = 11 : i64} {
  func.func @fusion_kernel(%arg0: i32, %arg1: memref<32x128xf32, #tpu.memory_space<vmem>>, %arg2: memref<64x32xf32, #tpu.memory_space<vmem>>, %arg3: memref<64x1xf32, #tpu.memory_space<vmem>>, %arg4: memref<32x64xf32, #tpu.memory_space<vmem>>, %arg5: memref<32x1xf32, #tpu.memory_space<vmem>>, %arg6: memref<3x128xf32, #tpu.memory_space<vmem>>, %arg7: memref<32x128xf32, #tpu.memory_space<vmem>>) attributes {dimension_semantics = [#tpu.dimension_semantics<parallel>], iteration_bounds = array<i64: 2>, scalar_prefetch = 0 : i64, scratch_operands = 0 : i64, tpu.core_type = #tpu.core_type<tc>, window_params = [{transform_indices = @transform_0, window_bounds = array<i64: 32, 128>}, {pipeline_mode = #tpu.pipeline_mode<synchronous>, transform_indices = @transform_1, window_bounds = array<i64: 64, 32>}, {pipeline_mode = #tpu.pipeline_mode<synchronous>, transform_indices = @transform_2, window_bounds = array<i64: 64, 1>}, {pipeline_mode = #tpu.pipeline_mode<synchronous>, transform_indices = @transform_3, window_bounds = array<i64: 32, 64>}, {pipeline_mode = #tpu.pipeline_mode<synchronous>, transform_indices = @transform_4, window_bounds = array<i64: 32, 1>}, {pipeline_mode = #tpu.pipeline_mode<synchronous>, transform_indices = @transform_5, window_bounds = array<i64: 3, 128>}, {transform_indices = @transform_6, window_bounds = array<i64: 32, 128>}]} {
    %c0 = arith.constant 0 : index
    %c0_0 = arith.constant 0 : index
    %0 = vector.load %arg2[%c0, %c0_0] : memref<64x32xf32, #tpu.memory_space<vmem>>, vector<64x32xf32>
    %c0_1 = arith.constant 0 : index
    %c0_2 = arith.constant 0 : index
    %1 = vector.load %arg1[%c0_1, %c0_2] : memref<32x128xf32, #tpu.memory_space<vmem>>, vector<32x128xf32>
    %cst = arith.constant dense<0.000000e+00> : vector<64x128xf32>
    %2 = tpu.matmul %0, %1, %cst {dimension_numbers = #tpu.dot_dimension_numbers<[1], [0], [0], [1], [0, 0, 1, 1], [], []>} : vector<64x32xf32>, vector<32x128xf32>, vector<64x128xf32> -> vector<64x128xf32>
    %c0_3 = arith.constant 0 : index
    %c0_4 = arith.constant 0 : index
    %3 = vector.load %arg3[%c0_3, %c0_4] : memref<64x1xf32, #tpu.memory_space<vmem>>, vector<64x1xf32>
    %4 = vector.broadcast %3 : vector<64x1xf32> to vector<64x128xf32>
    %5 = arith.addf %2, %4 : vector<64x128xf32>
    %6 = arith.mulf %5, %5 : vector<64x128xf32>
    %7 = arith.mulf %5, %6 : vector<64x128xf32>
    %cst_5 = arith.constant 4.471500e-02 : f32
    %8 = vector.broadcast %cst_5 : f32 to vector<64x128xf32>
    %9 = arith.mulf %8, %7 : vector<64x128xf32>
    %10 = arith.addf %5, %9 : vector<64x128xf32>
    %cst_6 = arith.constant 0.797884583 : f32
    %11 = vector.broadcast %cst_6 : f32 to vector<64x128xf32>
    %12 = arith.mulf %11, %10 : vector<64x128xf32>
    %13 = math.tanh %12 : vector<64x128xf32>
    %cst_7 = arith.constant 1.000000e+00 : f32
    %14 = vector.broadcast %cst_7 : f32 to vector<64x128xf32>
    %15 = arith.addf %14, %13 : vector<64x128xf32>
    %cst_8 = arith.constant 5.000000e-01 : f32
    %16 = vector.broadcast %cst_8 : f32 to vector<64x128xf32>
    %17 = arith.mulf %16, %15 : vector<64x128xf32>
    %18 = arith.mulf %5, %17 : vector<64x128xf32>
    %c0_9 = arith.constant 0 : index
    %c0_10 = arith.constant 0 : index
    %19 = vector.load %arg4[%c0_9, %c0_10] : memref<32x64xf32, #tpu.memory_space<vmem>>, vector<32x64xf32>
    %cst_11 = arith.constant dense<0.000000e+00> : vector<32x128xf32>
    %20 = tpu.matmul %19, %18, %cst_11 {dimension_numbers = #tpu.dot_dimension_numbers<[1], [0], [0], [1], [0, 0, 1, 1], [], []>} : vector<32x64xf32>, vector<64x128xf32>, vector<32x128xf32> -> vector<32x128xf32>
    %c0_12 = arith.constant 0 : index
    %c0_13 = arith.constant 0 : index
    %21 = vector.load %arg5[%c0_12, %c0_13] : memref<32x1xf32, #tpu.memory_space<vmem>>, vector<32x1xf32>
    %22 = vector.broadcast %21 : vector<32x1xf32> to vector<32x128xf32>
    %23 = arith.addf %20, %22 : vector<32x128xf32>
    %cst_14 = arith.constant dense<0.000000e+00> : vector<128xf32>
    %24 = vector.multi_reduction <add>, %23, %cst_14 [0] : vector<32x128xf32> to vector<128xf32>
    %25 = vector.shape_cast %24 : vector<128xf32> to vector<1x128xf32>
    %cst_15 = arith.constant 3.200000e+01 : f32
    %26 = vector.broadcast %cst_15 : f32 to vector<1x128xf32>
    %27 = arith.divf %25, %26 : vector<1x128xf32>
    %cst_16 = arith.constant 0.000000e+00 : f32
    %28 = vector.broadcast %cst_16 : f32 to vector<1x128xf32>
    %c1_i32 = arith.constant 1 : i32
    %29 = tpu.dynamic_rotate %27 by %c1_i32 dim 1 : vector<1x128xf32>, i32 -> vector<1x128xf32>
    %c0_17 = arith.constant 0 : index
    %c0_18 = arith.constant 0 : index
    %30 = vector.load %arg6[%c0_17, %c0_18] : memref<3x128xf32, #tpu.memory_space<vmem>>, vector<1x128xf32>
    %31 = arith.mulf %30, %29 : vector<1x128xf32>
    %32 = arith.addf %28, %31 : vector<1x128xf32>
    %c1 = arith.constant 1 : index
    %c0_19 = arith.constant 0 : index
    %33 = vector.load %arg6[%c1, %c0_19] : memref<3x128xf32, #tpu.memory_space<vmem>>, vector<1x128xf32>
    %34 = arith.mulf %33, %27 : vector<1x128xf32>
    %35 = arith.addf %32, %34 : vector<1x128xf32>
    %c127_i32 = arith.constant 127 : i32
    %36 = tpu.dynamic_rotate %27 by %c127_i32 dim 1 : vector<1x128xf32>, i32 -> vector<1x128xf32>
    %c2 = arith.constant 2 : index
    %c0_20 = arith.constant 0 : index
    %37 = vector.load %arg6[%c2, %c0_20] : memref<3x128xf32, #tpu.memory_space<vmem>>, vector<1x128xf32>
    %38 = arith.mulf %37, %36 : vector<1x128xf32>
    %39 = arith.addf %35, %38 : vector<1x128xf32>
    %40 = arith.negf %39 : vector<1x128xf32>
    %41 = math.exp %40 : vector<1x128xf32>
    %cst_21 = arith.constant 1.000000e+00 : f32
    %42 = vector.broadcast %cst_21 : f32 to vector<1x128xf32>
    %43 = arith.addf %42, %41 : vector<1x128xf32>
    %44 = arith.divf %42, %43 : vector<1x128xf32>
    %45 = vector.broadcast %44 : vector<1x128xf32> to vector<32x128xf32>
    %46 = arith.mulf %23, %45 : vector<32x128xf32>
    %c0_22 = arith.constant 0 : index
    %c0_23 = arith.constant 0 : index
    %47 = vector.load %arg7[%c0_22, %c0_23] : memref<32x128xf32, #tpu.memory_space<vmem>>, vector<32x128xf32>
    tpu.vector_store %arg7[%c0_22, %c0_23], %46 {strides = array<i32>} : memref<32x128xf32, #tpu.memory_space<vmem>>, vector<32x128xf32>,
    return
  }
  func.func @transform_0(%arg0: i32) -> (i32, i32) {
    %c0_i32 = arith.constant 0 : i32
    %c0_i32_0 = arith.constant 0 : i32
    return %c0_i32, %arg0 : i32, i32
  }
  func.func @transform_1(%arg0: i32) -> (i32, i32) {
    %c0_i32 = arith.constant 0 : i32
    %c0_i32_0 = arith.constant 0 : i32
    %c0_i32_1 = arith.constant 0 : i32
    return %c0_i32, %c0_i32_0 : i32, i32
  }
  func.func @transform_2(%arg0: i32) -> (i32, i32) {
    %c0_i32 = arith.constant 0 : i32
    %c0_i32_0 = arith.constant 0 : i32
    %c0_i32_1 = arith.constant 0 : i32
    return %c0_i32, %c0_i32_0 : i32, i32
  }
  func.func @transform_3(%arg0: i32) -> (i32, i32) {
    %c0_i32 = arith.constant 0 : i32
    %c0_i32_0 = arith.constant 0 : i32
    %c0_i32_1 = arith.constant 0 : i32
    return %c0_i32, %c0_i32_0 : i32, i32
  }
  func.func @transform_4(%arg0: i32) -> (i32, i32) {
    %c0_i32 = arith.constant 0 : i32
    %c0_i32_0 = arith.constant 0 : i32
    %c0_i32_1 = arith.constant 0 : i32
    return %c0_i32, %c0_i32_0 : i32, i32
  }
  func.func @transform_5(%arg0: i32) -> (i32, i32) {
    %c0_i32 = arith.constant 0 : i32
    %c0_i32_0 = arith.constant 0 : i32
    %c0_i32_1 = arith.constant 0 : i32
    return %c0_i32, %c0_i32_0 : i32, i32
  }
  func.func @transform_6(%arg0: i32) -> (i32, i32) {
    %c0_i32 = arith.constant 0 : i32
    %c0_i32_0 = arith.constant 0 : i32
    return %c0_i32, %arg0 : i32, i32
  }
}

</mosaic_0001>

<llo_original>
// kernel: tpu_custom_call.1
$region0: #{tpu_custom_call.1}
  #allocation0 [shape = 'u32[]', space=smem, size = 0x4, offset = 0x4, fixed_abs, tag = 'smem constant byte address 0x4 - core index']
  #allocation1 [shape = 'u32[72,128]{1,0:T(1,128)}', space=vmem, size = 0x9000, scoped, tag = 'internal scratch']
  %s0 = inlined_call_operand.vmem [shape: f32[32,256], index: 0, kind: input, shape index: {}]
  %s1 = inlined_call_operand.vmem [shape: f32[64,32], index: 1, kind: input, shape index: {}]
  %s2 = inlined_call_operand.vmem [shape: f32[64,1], index: 2, kind: input, shape index: {}]
  %s3 = inlined_call_operand.vmem [shape: f32[32,64], index: 3, kind: input, shape index: {}]
  %s4 = inlined_call_operand.vmem [shape: f32[32,1], index: 4, kind: input, shape index: {}]
  %s5 = inlined_call_operand.vmem [shape: f32[3,128], index: 5, kind: input, shape index: {}]
  %s6 = inlined_call_operand.hbm [shape: f32[32,256], index: 6, kind: output, shape index: {}]
  %s7 = sld [smem:[#allocation0]]
  $region95: #{tpu_custom_call.1} parent=0
    _
  %s9 = ssub.s32 1, %s7
  %s10 = scalar_select 0, %s9, %s7
  $region1: #{tpu_custom_call.1} parent=0
    #allocation2 [shape = 'u8[32768]{0}', space=vmem, size = 0x8000, scoped, tag = 'input window, operand 0']
    #allocation3 [shape = 'u8[32768]{0}', space=vmem, size = 0x8000, scoped, tag = 'output window, operand 0']
    #allocation4 [shape = 's32[2]{0}', space=sflag, size = 0x8, scoped, tag = 'scoped memory for tpu_custom_call.1']
    %11 = vsyncpa [#allocation4], 0
    %s12 = scalar_lea.sflag [#allocation4], 1
    %13 = vsyncpa %s12, 0
    loop: start=0, step=1, limit=4
    $region2: #{tpu_custom_call.1} parent=1 // loop_pre_header
      _
    $region3: #{tpu_custom_call.1} parent=1 // loop_header
      %s15 = sphi 0, %s19
      %p16 = scmp.ge.s32.totalorder %s15, 4
      %s25 = sphi 0, %s27
      %s28 = sphi 0, %s25
      %s29 = sphi 0, %s28
      %s45 = sphi 0, %s29
      %s49 = sphi 0, %s49
      %s51 = sphi 0, %s49
      %s52 = sphi 0, %s51
      %s66 = sphi 0, %s52
      %s70 = sphi 0, %s70
      %s72 = sphi 0, %s70
      %s73 = sphi 0, %s72
      %s87 = sphi 0, %s73
      %s91 = sphi 0, %s91
      %s93 = sphi 0, %s91
      %s94 = sphi 0, %s93
      %s108 = sphi 0, %s94
      %s112 = sphi 0, %s112
      %s114 = sphi 0, %s112
      %s115 = sphi 0, %s114
      %s129 = sphi 0, %s115
      %s133 = sphi 0, %s133
      %s135 = sphi 0, %s133
      %s136 = sphi 0, %s135
      %s150 = sphi 0, %s136
      %s156 = sphi 0, %s158
      %s159 = sphi 0, %s156
      %s160 = sphi 0, %s159
      %s176 = sphi 0, %s160
    $region4: #{tpu_custom_call.1} parent=1 // loop_header_branch
      %18 = sbr.rel (%p16) target = $region8
    $region5: #{tpu_custom_call.1} parent=1 // loop_body
      %s20 = ssub.s32 %s15, 1
      %s21 = ssub.s32 %s15, 2
      %s22 = sadd.s32 %s15, 1
      %s23 = ssub.s32 %s15, %s22
      %p24 = scmp.eq.s32.totalorder %s23, 0
      %s26 = sadd.s32 %s25, 1
      %s27 = scalar_select %p24, %s25, %s26
      %p30 = pneg %p24
      %p31 = scmp.eq.s32.totalorder %s15, 1
      %p32 = por %p30, %p31
      %p33 = scmp.ne.s32.totalorder %s25, %s28
      %p34 = scmp.eq.s32.totalorder %s15, 0
      %p35 = por %p33, %p34
      %p36 = scmp.ne.s32.totalorder %s25, %s28
      %p37 = scmp.eq.s32.totalorder %s20, 1
      %p38 = por %p36, %p37
      %p39 = scmp.ne.s32.totalorder %s28, %s29
      %p40 = scmp.eq.s32.totalorder %s20, 0
      %p41 = por %p39, %p40
      %p42 = scmp.ne.s32.totalorder %s28, %s29
      %p43 = scmp.eq.s32.totalorder %s21, 1
      %p44 = por %p42, %p43
      %p46 = scmp.ne.s32.totalorder %s29, %s45
      %p47 = scmp.eq.s32.totalorder %s21, 0
      %p48 = por %p46, %p47
      %s50 = sadd.s32 %s49, 1
      %p53 = scmp.eq.s32.totalorder %s15, 1
      %p54 = scmp.ne.s32.totalorder %s49, %s51
      %p55 = scmp.eq.s32.totalorder %s15, 0
      %p56 = por %p54, %p55
      %p57 = scmp.ne.s32.totalorder %s49, %s51
      %p58 = scmp.eq.s32.totalorder %s20, 1
      %p59 = por %p57, %p58
      %p60 = scmp.ne.s32.totalorder %s51, %s52
      %p61 = scmp.eq.s32.totalorder %s20, 0
      %p62 = por %p60, %p61
      %p63 = scmp.ne.s32.totalorder %s51, %s52
      %p64 = scmp.eq.s32.totalorder %s21, 1
      %p65 = por %p63, %p64
      %p67 = scmp.ne.s32.totalorder %s52, %s66
      %p68 = scmp.eq.s32.totalorder %s21, 0
      %p69 = por %p67, %p68
      %s71 = sadd.s32 %s70, 1
      %p74 = scmp.eq.s32.totalorder %s15, 1
      %p75 = scmp.ne.s32.totalorder %s70, %s72
      %p76 = scmp.eq.s32.totalorder %s15, 0
      %p77 = por %p75, %p76
      %p78 = scmp.ne.s32.totalorder %s70, %s72
      %p79 = scmp.eq.s32.totalorder %s20, 1
      %p80 = por %p78, %p79
      %p81 = scmp.ne.s32.totalorder %s72, %s73
      %p82 = scmp.eq.s32.totalorder %s20, 0
      %p83 = por %p81, %p82
      %p84 = scmp.ne.s32.totalorder %s72, %s73
      %p85 = scmp.eq.s32.totalorder %s21, 1
      %p86 = por %p84, %p85
      %p88 = scmp.ne.s32.totalorder %s73, %s87
      %p89 = scmp.eq.s32.totalorder %s21, 0
      %p90 = por %p88, %p89
      %s92 = sadd.s32 %s91, 1
      %p95 = scmp.eq.s32.totalorder %s15, 1
      %p96 = scmp.ne.s32.totalorder %s91, %s93
      %p97 = scmp.eq.s32.totalorder %s15, 0
      %p98 = por %p96, %p97
      %p99 = scmp.ne.s32.totalorder %s91, %s93
      %p100 = scmp.eq.s32.totalorder %s20, 1
      %p101 = por %p99, %p100
      %p102 = scmp.ne.s32.totalorder %s93, %s94
      %p103 = scmp.eq.s32.totalorder %s20, 0
      %p104 = por %p102, %p103
      %p105 = scmp.ne.s32.totalorder %s93, %s94
      %p106 = scmp.eq.s32.totalorder %s21, 1
      %p107 = por %p105, %p106
      %p109 = scmp.ne.s32.totalorder %s94, %s108
      %p110 = scmp.eq.s32.totalorder %s21, 0
      %p111 = por %p109, %p110
      %s113 = sadd.s32 %s112, 1
      %p116 = scmp.eq.s32.totalorder %s15, 1
      %p117 = scmp.ne.s32.totalorder %s112, %s114
      %p118 = scmp.eq.s32.totalorder %s15, 0
      %p119 = por %p117, %p118
      %p120 = scmp.ne.s32.totalorder %s112, %s114
      %p121 = scmp.eq.s32.totalorder %s20, 1
      %p122 = por %p120, %p121
      %p123 = scmp.ne.s32.totalorder %s114, %s115
      %p124 = scmp.eq.s32.totalorder %s20, 0
      %p125 = por %p123, %p124
      %p126 = scmp.ne.s32.totalorder %s114, %s115
      %p127 = scmp.eq.s32.totalorder %s21, 1
      %p128 = por %p126, %p127
      %p130 = scmp.ne.s32.totalorder %s115, %s129
      %p131 = scmp.eq.s32.totalorder %s21, 0
      %p132 = por %p130, %p131
      %s134 = sadd.s32 %s133, 1
      %p137 = scmp.eq.s32.totalorder %s15, 1
      %p138 = scmp.ne.s32.totalorder %s133, %s135
      %p139 = scmp.eq.s32.totalorder %s15, 0
      %p140 = por %p138, %p139
      %p141 = scmp.ne.s32.totalorder %s133, %s135
      %p142 = scmp.eq.s32.totalorder %s20, 1
      %p143 = por %p141, %p142
      %p144 = scmp.ne.s32.totalorder %s135, %s136
      %p145 = scmp.eq.s32.totalorder %s20, 0
      %p146 = por %p144, %p145
      %p147 = scmp.ne.s32.totalorder %s135, %s136
      %p148 = scmp.eq.s32.totalorder %s21, 1
      %p149 = por %p147, %p148
      %p151 = scmp.ne.s32.totalorder %s136, %s150
      %p152 = scmp.eq.s32.totalorder %s21, 0
      %p153 = por %p151, %p152
      %s154 = ssub.s32 %s15, %s22
      %p155 = scmp.eq.s32.totalorder %s154, 0
      %s157 = sadd.s32 %s156, 1
      %s158 = scalar_select %p155, %s156, %s157
      %p161 = pneg %p155
      %p162 = scmp.eq.s32.totalorder %s15, 1
      %p163 = por %p161, %p162
      %p164 = scmp.ne.s32.totalorder %s156, %s159
      %p165 = scmp.eq.s32.totalorder %s15, 0
      %p166 = por %p164, %p165
      %p167 = scmp.ne.s32.totalorder %s156, %s159
      %p168 = scmp.eq.s32.totalorder %s20, 1
      %p169 = por %p167, %p168
      %p170 = scmp.ne.s32.totalorder %s159, %s160
      %p171 = scmp.eq.s32.totalorder %s20, 0
      %p172 = por %p170, %p171
      %p173 = scmp.ne.s32.totalorder %s159, %s160
      %p174 = scmp.eq.s32.totalorder %s21, 1
      %p175 = por %p173, %p174
      %p177 = scmp.ne.s32.totalorder %s160, %s176
      %p178 = scmp.eq.s32.totalorder %s21, 0
      %p179 = por %p177, %p178
      %p180 = scmp.le.s32.totalorder 1, %s15
      %p181 = scmp.lt.s32.totalorder %s15, 3
      %p182 = pnand %p180, %p181
      %p183 = pneg %p182
      // Predicated region
      $region9: #{tpu_custom_call.1} parent=5 // pred_check
        _
      $region10: #{tpu_custom_call.1} parent=5 // pred_check_branch
        %185 = sbr.rel (%p182) target = $region12
      $region11: #{tpu_custom_call.1} parent=5 // pred_region
        %s186 = ssub.s32 %s15, 1
        // Predicated region
        $region13: #{tpu_custom_call.1} parent=11 // pred_check
          %p187 = pneg %p62
        $region14: #{tpu_custom_call.1} parent=11 // pred_check_branch
          %189 = sbr.rel (%p187) target = $region16
        $region15: #{tpu_custom_call.1} parent=11 // pred_region
          _
        $region16: #{tpu_custom_call.1} parent=11 // pred_fallthru
          _
        // Predicated region
        $region17: #{tpu_custom_call.1} parent=11 // pred_check
          %p190 = pneg %p83
        $region18: #{tpu_custom_call.1} parent=11 // pred_check_branch
          %192 = sbr.rel (%p190) target = $region20
        $region19: #{tpu_custom_call.1} parent=11 // pred_region
          _
        $region20: #{tpu_custom_call.1} parent=11 // pred_fallthru
          _
        // Predicated region
        $region21: #{tpu_custom_call.1} parent=11 // pred_check
          %p193 = pneg %p104
        $region22: #{tpu_custom_call.1} parent=11 // pred_check_branch
          %195 = sbr.rel (%p193) target = $region24
        $region23: #{tpu_custom_call.1} parent=11 // pred_region
          _
        $region24: #{tpu_custom_call.1} parent=11 // pred_fallthru
          _
        // Predicated region
        $region25: #{tpu_custom_call.1} parent=11 // pred_check
          %p196 = pneg %p125
        $region26: #{tpu_custom_call.1} parent=11 // pred_check_branch
          %198 = sbr.rel (%p196) target = $region28
        $region27: #{tpu_custom_call.1} parent=11 // pred_region
          _
        $region28: #{tpu_custom_call.1} parent=11 // pred_fallthru
          _
        // Predicated region
        $region29: #{tpu_custom_call.1} parent=11 // pred_check
          %p199 = pneg %p146
        $region30: #{tpu_custom_call.1} parent=11 // pred_check_branch
          %201 = sbr.rel (%p199) target = $region32
        $region31: #{tpu_custom_call.1} parent=11 // pred_region
          _
        $region32: #{tpu_custom_call.1} parent=11 // pred_fallthru
          _
      $region12: #{tpu_custom_call.1} parent=5 // pred_fallthru
        _
      %p202 = scmp.lt.s32.totalorder %s15, 2
      // Predicated region
      $region33: #{tpu_custom_call.1} parent=5 // pred_check
        %p203 = pneg %p202
      $region34: #{tpu_custom_call.1} parent=5 // pred_check_branch
        %205 = sbr.rel (%p203) target = $region36
      $region35: #{tpu_custom_call.1} parent=5 // pred_region
        // Predicated region
        $region37: #{tpu_custom_call.1} parent=35 // pred_check
          %p206 = pneg %p35
        $region38: #{tpu_custom_call.1} parent=35 // pred_check_branch
          %208 = sbr.rel (%p206) target = $region40
        $region39: #{tpu_custom_call.1} parent=35 // pred_region
          %s209 = sand.u32 %s25, 1
          %s210 = sand.u32 %s25, 1
          %s211 = smul.addr %s210, 32
          %s212 = scalar_lea.vmem [#allocation2], %s211
          %s213 = smul.addr %s15, 8
          %s214 = scalar_lea.vmem %s0, %s213
          // Predicated region
          $region41: #{tpu_custom_call.1} parent=39 // pred_check
            _
          $region42: #{tpu_custom_call.1} parent=39 // pred_check_branch
            %216 = sbr.rel (0) target = $region44
          $region43: #{tpu_custom_call.1} parent=39 // pred_region
            // Predicated region
            $region45: #{tpu_custom_call.1} parent=43 // pred_check
              _
            $region46: #{tpu_custom_call.1} parent=43 // pred_check_branch
              %218 = sbr.rel (0) target = $region48
            $region47: #{tpu_custom_call.1} parent=43 // pred_region
              // Predicated region
              $region60: #{tpu_custom_call.1} parent=47 // pred_check
                _
              $region61: #{tpu_custom_call.1} parent=47 // pred_check_branch
                %240 = sbr.rel (0) target = $region63
              $region62: #{tpu_custom_call.1} parent=47 // pred_region
                loop: start=0, step=1, limit=1
                $region64: #{tpu_custom_call.1} parent=62 // loop_pre_header
                  _
                $region65: #{tpu_custom_call.1} parent=62 // loop_header
                  %s242 = sphi 0, %s246
                  %p243 = scmp.ge.s32.totalorder %s242, 1
                  %s247 = sphi %s214, %s214
                  %s248 = sphi %s212, %s212
                $region66: #{tpu_custom_call.1} parent=62 // loop_header_branch
                  %245 = sbr.rel (%p243) target = $region70
                $region67: #{tpu_custom_call.1} parent=62 // loop_body
                  %v249 = vld [vmem:[%s247] sm:$0xff]
                  %250 = vst [vmem:[%s248] sm:$0xff] %v249
                  %v251 = vld [vmem:[%s247 + $0x10] sm:$0xff]
                  %252 = vst [vmem:[%s248 + $0x8] sm:$0xff] %v251
                  %v253 = vld [vmem:[%s247 + $0x20] sm:$0xff]
                  %254 = vst [vmem:[%s248 + $0x10] sm:$0xff] %v253
                  %v255 = vld [vmem:[%s247 + $0x30] sm:$0xff]
                  %256 = vst [vmem:[%s248 + $0x18] sm:$0xff] %v255
                $region68: #{tpu_custom_call.1} parent=62 // loop_footer
                  %s246 = sadd.s32 1, %s242
                $region69: #{tpu_custom_call.1} parent=62 // loop_footer_branch
                  %241 = sbr.rel target = $region65
                $region70: #{tpu_custom_call.1} parent=62 // loop_exit
                  _
              $region63: #{tpu_custom_call.1} parent=47 // pred_fallthru
                _
              // Predicated region
              $region71: #{tpu_custom_call.1} parent=47 // pred_check
                _
              $region72: #{tpu_custom_call.1} parent=47 // pred_check_branch
                %258 = sbr.rel target = $region74
              $region73: #{tpu_custom_call.1} parent=47 // pred_region
                _
              $region74: #{tpu_custom_call.1} parent=47 // pred_fallthru
                _
            $region48: #{tpu_custom_call.1} parent=43 // pred_fallthru
              _
            // Predicated region
            $region49: #{tpu_custom_call.1} parent=43 // pred_check
              _
            $region50: #{tpu_custom_call.1} parent=43 // pred_check_branch
              %220 = sbr.rel target = $region52
            $region51: #{tpu_custom_call.1} parent=43 // pred_region
              %s222 = ssub.s32 256, 1
              loop: start=0, step=1, limit=1
              $region53: #{tpu_custom_call.1} parent=51 // loop_pre_header
                _
              $region54: #{tpu_custom_call.1} parent=51 // loop_header
                %s224 = sphi 0, %s228
                %p225 = scmp.ge.s32.totalorder %s224, 1
                %s229 = sphi %s214, %s214
                %s230 = sphi %s212, %s212
              $region55: #{tpu_custom_call.1} parent=51 // loop_header_branch
                %227 = sbr.rel (%p225) target = $region59
              $region56: #{tpu_custom_call.1} parent=51 // loop_body
                %v231 = vld [vmem:[%s229] sm:%s222]
                %232 = vst [vmem:[%s230] sm:%s222] %v231
                %v233 = vld [vmem:[%s229 + $0x10] sm:%s222]
                %234 = vst [vmem:[%s230 + $0x8] sm:%s222] %v233
                %v235 = vld [vmem:[%s229 + $0x20] sm:%s222]
                %236 = vst [vmem:[%s230 + $0x10] sm:%s222] %v235
                %v237 = vld [vmem:[%s229 + $0x30] sm:%s222]
                %238 = vst [vmem:[%s230 + $0x18] sm:%s222] %v237
              $region57: #{tpu_custom_call.1} parent=51 // loop_footer
                %s228 = sadd.s32 1, %s224
              $region58: #{tpu_custom_call.1} parent=51 // loop_footer_branch
                %223 = sbr.rel target = $region54
              $region59: #{tpu_custom_call.1} parent=51 // loop_exit
                _
            $region52: #{tpu_custom_call.1} parent=43 // pred_fallthru
              _
          $region44: #{tpu_custom_call.1} parent=39 // pred_fallthru
            _
          %259 = vnop
        $region40: #{tpu_custom_call.1} parent=35 // pred_fallthru
          _
      $region36: #{tpu_custom_call.1} parent=5 // pred_fallthru
        _
      %p260 = scmp.le.s32.totalorder 1, %s15
      %p261 = scmp.lt.s32.totalorder %s15, 3
      %p262 = pnand %p260, %p261
      %p263 = pneg %p262
      // Predicated region
      $region75: #{tpu_custom_call.1} parent=5 // pred_check
        _
      $region76: #{tpu_custom_call.1} parent=5 // pred_check_branch
        %265 = sbr.rel (%p262) target = $region78
      $region77: #{tpu_custom_call.1} parent=5 // pred_region
        %s266 = ssub.s32 %s15, 1
        %s267 = sand.u32 %s28, 1
        %s268 = sand.u32 %s28, 1
        %s269 = smul.addr %s268, 32
        %s270 = scalar_lea.vmem [#allocation2], %s269
        // Predicated region
        $region79: #{tpu_custom_call.1} parent=77 // pred_check
          %p271 = pneg %p41
        $region80: #{tpu_custom_call.1} parent=77 // pred_check_branch
          %273 = sbr.rel (%p271) target = $region82
        $region81: #{tpu_custom_call.1} parent=77 // pred_region
          _
        $region82: #{tpu_custom_call.1} parent=77 // pred_fallthru
          _
        %s274 = sand.u32 %s28, 1
        %s275 = sand.u32 %s28, 1
        %s276 = smul.addr %s275, 32
        %s277 = scalar_lea.vmem [#allocation2], %s276
        %p278 = pneg %p41
        %p279 = pneg %p38
        %p280 = pneg %p62
        %p281 = pneg %p59
        %p282 = pneg %p83
        %p283 = pneg %p80
        %p284 = pneg %p104
        %p285 = pneg %p101
        %p286 = pneg %p125
        %p287 = pneg %p122
        %p288 = pneg %p146
        %p289 = pneg %p143
        %p290 = pneg %p172
        %p291 = pneg %p169
        %s292 = sand.u32 %s159, 1
        %s293 = scalar_lea.sflag [#allocation4], %s292
        %s294 = sand.u32 %s159, 1
        %s295 = smul.addr %s294, 32
        %s296 = scalar_lea.vmem [#allocation3], %s295
        %v297 = vld [vmem:[%s1] sm:$0xff]
        %v298 = vld [vmem:[%s1 + $0x8] sm:$0xff]
        %v299 = vld [vmem:[%s1 + $0x10] sm:$0xff]
        %v300 = vld [vmem:[%s1 + $0x18] sm:$0xff]
        %v301 = vld [vmem:[%s1 + $0x20] sm:$0xff]
        %v302 = vld [vmem:[%s1 + $0x28] sm:$0xff]
        %v303 = vld [vmem:[%s1 + $0x30] sm:$0xff]
        %v304 = vld [vmem:[%s1 + $0x38] sm:$0xff]
        %v305 = vld [vmem:[%s270] sm:$0xff]
        %v306 = vld [vmem:[%s270 + $0x8] sm:$0xff]
        %v307 = vld [vmem:[%s270 + $0x10] sm:$0xff]
        %v308 = vld [vmem:[%s270 + $0x18] sm:$0xff]
        %v309 = vld [vmem:[%s2] sm:$0xff]
        %v310 = vld [vmem:[%s2 + $0x8] sm:$0xff]
        %v311 = vld [vmem:[%s2 + $0x10] sm:$0xff]
        %v312 = vld [vmem:[%s2 + $0x18] sm:$0xff]
        %v313 = vld [vmem:[%s2 + $0x20] sm:$0xff]
        %v314 = vld [vmem:[%s2 + $0x28] sm:$0xff]
        %v315 = vld [vmem:[%s2 + $0x30] sm:$0xff]
        %v316 = vld [vmem:[%s2 + $0x38] sm:$0xff]
        %318 = vset.pattern.permute.xlu0 0
        %319 = vperm.xlu0 %318, %v309
        %v320 = vpop.permute.xlu0 %319
        %323 = vset.pattern.permute.xlu0 0
        %324 = vperm.xlu0 %323, %v310
        %v325 = vpop.permute.xlu0 %324
        %328 = vset.pattern.permute.xlu0 0
        %329 = vperm.xlu0 %328, %v311
        %v330 = vpop.permute.xlu0 %329
        %333 = vset.pattern.permute.xlu0 0
        %334 = vperm.xlu0 %333, %v312
        %v335 = vpop.permute.xlu0 %334
        %338 = vset.pattern.permute.xlu0 0
        %339 = vperm.xlu0 %338, %v313
        %v340 = vpop.permute.xlu0 %339
        %343 = vset.pattern.permute.xlu0 0
        %344 = vperm.xlu0 %343, %v314
        %v345 = vpop.permute.xlu0 %344
        %348 = vset.pattern.permute.xlu0 0
        %349 = vperm.xlu0 %348, %v315
        %v350 = vpop.permute.xlu0 %349
        %353 = vset.pattern.permute.xlu0 0
        %354 = vperm.xlu0 %353, %v316
        %v355 = vpop.permute.xlu0 %354
        %vm357 = vcmask 261120
        %v359 = vsel %vm357, %v297, 0
        %v362 = vsel %vm357, %v298, 0
        %v365 = vsel %vm357, %v299, 0
        %v368 = vsel %vm357, %v300, 0
        %v371 = vsel %vm357, %v301, 0
        %v374 = vsel %vm357, %v302, 0
        %v377 = vsel %vm357, %v303, 0
        %v380 = vsel %vm357, %v304, 0
        %382 = vmatpush.msra.mxu0 0.0
        %383 = vmatpush.msra.mxu0 0.0
        %384 = vmatpush.msra.mxu0 0.0
        %385 = vmatpush.msra.mxu0 0.0
        %386 = vmatpush.msra.mxu0 0.0
        %387 = vmatpush.msra.mxu0 0.0
        %388 = vmatpush.msra.mxu0 0.0
        %389 = vmatpush.msra.mxu0 0.0
        %390 = vmatpush.msra.mxu0 0.0
        %391 = vmatpush.msra.mxu0 0.0
        %392 = vmatpush.msra.mxu0 0.0
        %393 = vmatpush.msra.mxu0 0.0
        %394 = vmatpush.msra.mxu0 %v308
        %395 = vmatpush.msra.mxu0 %v307
        %396 = vmatpush.msra.mxu0 %v306
        %397 = vmatpush.msra.mxu0 %v305
        %398 = vmatmul.f32.gmra.mxu0 %v359
        %v399 = vpop.f32.mrf.mxu0
        %v400 = vadd.f32 %v320, %v399
        %401 = vmatmul.f32.gmra.mxu0 %v362
        %v402 = vpop.f32.mrf.mxu0
        %v403 = vadd.f32 %v325, %v402
        %404 = vmatmul.f32.gmra.mxu0 %v365
        %v405 = vpop.f32.mrf.mxu0
        %v406 = vadd.f32 %v330, %v405
        %407 = vmatmul.f32.gmra.mxu0 %v368
        %v408 = vpop.f32.mrf.mxu0
        %v409 = vadd.f32 %v335, %v408
        %410 = vmatmul.f32.gmra.mxu0 %v371
        %v411 = vpop.f32.mrf.mxu0
        %v412 = vadd.f32 %v340, %v411
        %413 = vmatmul.f32.gmra.mxu0 %v374
        %v414 = vpop.f32.mrf.mxu0
        %v415 = vadd.f32 %v345, %v414
        %416 = vmatmul.f32.gmra.mxu0 %v377
        %v417 = vpop.f32.mrf.mxu0
        %v418 = vadd.f32 %v350, %v417
        %419 = vmatmul.f32.gmra.mxu0 %v380
        %v420 = vpop.f32.mrf.mxu0
        %v421 = vadd.f32 %v355, %v420
        %422 = vdwg.mxu0
        %v423 = vmul.f32 %v400, %v400
        %v424 = vmul.f32 %v403, %v403
        %v425 = vmul.f32 %v406, %v406
        %v426 = vmul.f32 %v409, %v409
        %v427 = vmul.f32 %v412, %v412
        %v428 = vmul.f32 %v415, %v415
        %v429 = vmul.f32 %v418, %v418
        %v430 = vmul.f32 %v421, %v421
        %v431 = vmul.f32 %v400, %v423
        %v432 = vmul.f32 %v403, %v424
        %v433 = vmul.f32 %v406, %v425
        %v434 = vmul.f32 %v409, %v426
        %v435 = vmul.f32 %v412, %v427
        %v436 = vmul.f32 %v415, %v428
        %v437 = vmul.f32 %v418, %v429
        %v438 = vmul.f32 %v421, %v430
        %v439 = vmul.f32 %v431, 0.044715
        %v440 = vmul.f32 %v432, 0.044715
        %v441 = vmul.f32 %v433, 0.044715
        %v442 = vmul.f32 %v434, 0.044715
        %v443 = vmul.f32 %v435, 0.044715
        %v444 = vmul.f32 %v436, 0.044715
        %v445 = vmul.f32 %v437, 0.044715
        %v446 = vmul.f32 %v438, 0.044715
        %v447 = vadd.f32 %v400, %v439
        %v448 = vadd.f32 %v403, %v440
        %v449 = vadd.f32 %v406, %v441
        %v450 = vadd.f32 %v409, %v442
        %v451 = vadd.f32 %v412, %v443
        %v452 = vadd.f32 %v415, %v444
        %v453 = vadd.f32 %v418, %v445
        %v454 = vadd.f32 %v421, %v446
        %v455 = vmul.f32 %v447, 0.7978846
        %v456 = vmul.f32 %v448, 0.7978846
        %v457 = vmul.f32 %v449, 0.7978846
        %v458 = vmul.f32 %v450, 0.7978846
        %v459 = vmul.f32 %v451, 0.7978846
        %v460 = vmul.f32 %v452, 0.7978846
        %v461 = vmul.f32 %v453, 0.7978846
        %v462 = vmul.f32 %v454, 0.7978846
        %v463 = vtanh.pop %v455
        %v464 = vtanh.pop %v456
        %v465 = vtanh.pop %v457
        %v466 = vtanh.pop %v458
        %v467 = vtanh.pop %v459
        %v468 = vtanh.pop %v460
        %v469 = vtanh.pop %v461
        %v470 = vtanh.pop %v462
        %v471 = vadd.f32 %v463, 1.0
        %v472 = vadd.f32 %v464, 1.0
        %v473 = vadd.f32 %v465, 1.0
        %v474 = vadd.f32 %v466, 1.0
        %v475 = vadd.f32 %v467, 1.0
        %v476 = vadd.f32 %v468, 1.0
        %v477 = vadd.f32 %v469, 1.0
        %v478 = vadd.f32 %v470, 1.0
        %v479 = vmul.f32 %v471, 0.5
        %v480 = vmul.f32 %v472, 0.5
        %v481 = vmul.f32 %v473, 0.5
        %v482 = vmul.f32 %v474, 0.5
        %v483 = vmul.f32 %v475, 0.5
        %v484 = vmul.f32 %v476, 0.5
        %v485 = vmul.f32 %v477, 0.5
        %v486 = vmul.f32 %v478, 0.5
        %v487 = vmul.f32 %v400, %v479
        %v488 = vmul.f32 %v403, %v480
        %v489 = vmul.f32 %v406, %v481
        %v490 = vmul.f32 %v409, %v482
        %v491 = vmul.f32 %v412, %v483
        %v492 = vmul.f32 %v415, %v484
        %v493 = vmul.f32 %v418, %v485
        %v494 = vmul.f32 %v421, %v486
        %v495 = vld [vmem:[%s3] sm:$0xff]
        %v496 = vld [vmem:[%s3 + $0x8] sm:$0xff]
        %v497 = vld [vmem:[%s3 + $0x10] sm:$0xff]
        %v498 = vld [vmem:[%s3 + $0x18] sm:$0xff]
        %v499 = vld [vmem:[%s4] sm:$0xff]
        %v500 = vld [vmem:[%s4 + $0x8] sm:$0xff]
        %v501 = vld [vmem:[%s4 + $0x10] sm:$0xff]
        %v502 = vld [vmem:[%s4 + $0x18] sm:$0xff]
        %504 = vset.pattern.permute.xlu0 0
        %505 = vperm.xlu0 %504, %v499
        %v506 = vpop.permute.xlu0 %505
        %509 = vset.pattern.permute.xlu0 0
        %510 = vperm.xlu0 %509, %v500
        %v511 = vpop.permute.xlu0 %510
        %514 = vset.pattern.permute.xlu0 0
        %515 = vperm.xlu0 %514, %v501
        %v516 = vpop.permute.xlu0 %515
        %519 = vset.pattern.permute.xlu0 0
        %520 = vperm.xlu0 %519, %v502
        %v521 = vpop.permute.xlu0 %520
        %vm523 = vcmask 523264
        %v525 = vsel %vm523, %v495, 0
        %v528 = vsel %vm523, %v496, 0
        %v531 = vsel %vm523, %v497, 0
        %v534 = vsel %vm523, %v498, 0
        %536 = vmatpush.msra.mxu0 0.0
        %537 = vmatpush.msra.mxu0 0.0
        %538 = vmatpush.msra.mxu0 0.0
        %539 = vmatpush.msra.mxu0 0.0
        %540 = vmatpush.msra.mxu0 0.0
        %541 = vmatpush.msra.mxu0 0.0
        %542 = vmatpush.msra.mxu0 0.0
        %543 = vmatpush.msra.mxu0 0.0
        %544 = vmatpush.msra.mxu0 %v494
        %545 = vmatpush.msra.mxu0 %v493
        %546 = vmatpush.msra.mxu0 %v492
        %547 = vmatpush.msra.mxu0 %v491
        %548 = vmatpush.msra.mxu0 %v490
        %549 = vmatpush.msra.mxu0 %v489
        %550 = vmatpush.msra.mxu0 %v488
        %551 = vmatpush.msra.mxu0 %v487
        %552 = vmatmul.f32.gmra.mxu0 %v525
        %v553 = vpop.f32.mrf.mxu0
        %v554 = vadd.f32 %v506, %v553
        %555 = vmatmul.f32.gmra.mxu0 %v528
        %v556 = vpop.f32.mrf.mxu0
        %v557 = vadd.f32 %v511, %v556
        %558 = vmatmul.f32.gmra.mxu0 %v531
        %v559 = vpop.f32.mrf.mxu0
        %v560 = vadd.f32 %v516, %v559
        %561 = vmatmul.f32.gmra.mxu0 %v534
        %v562 = vpop.f32.mrf.mxu0
        %v563 = vadd.f32 %v521, %v562
        %564 = vdwg.mxu0
        %v565 = vadd.f32 %v554, %v557
        %v566 = vadd.f32 %v565, %v560
        %v567 = vadd.f32 %v566, %v563
        %v568 = vrot.slane %v567, 4
        %v569 = vadd.f32 %v567, %v568
        %v570 = vrot.slane %v569, 2
        %v571 = vadd.f32 %v569, %v570
        %v572 = vrot.slane %v571, 1
        %v573 = vadd.f32 %v571, %v572
        %v574 = vrcp.pop 32.0
        %v575 = vmul.f32 32.0, %v574
        %v576 = vsub.f32 1.0, %v575
        %v577 = vmul.f32 %v574, %v576
        %v578 = vadd.f32 %v574, %v577
        %vm579 = vweird.f32 %v574
        %v580 = vsel %vm579, %v574, %v578
        %v581 = vmul.f32 %v573, %v580
        %582 = vrot.lane.b32.xlu0 %v581, 1
        %v583 = vpop.permute.xlu0 %582
        %v584 = vld [vmem:[%s5] sm:$0x1]
        %v585 = vmul.f32 %v584, %v583
        %v586 = vadd.f32 %v585, 0.0
        %v587 = vld [vmem:[%s5 + $0x1] sm:$0x1]
        %v588 = vmul.f32 %v587, %v581
        %v589 = vadd.f32 %v586, %v588
        %590 = vrot.lane.b32.xlu0 %v581, 127
        %v591 = vpop.permute.xlu0 %590
        %v592 = vld [vmem:[%s5 + $0x2] sm:$0x1]
        %v593 = vmul.f32 %v592, %v591
        %v594 = vadd.f32 %v589, %v593
        %v595 = vxor.u32 %v594, 2147483648
        %v596 = vmul.f32 %v595, 1.442695
        %v597 = vpow.pop %v596
        %v598 = vadd.f32 %v597, 1.0
        %v599 = vrcp.pop %v598
        %v600 = vmul.f32 %v598, %v599
        %v601 = vsub.f32 1.0, %v600
        %v602 = vmul.f32 %v599, %v601
        %v603 = vadd.f32 %v599, %v602
        %vm604 = vweird.f32 %v598
        %vm605 = vweird.f32 %v599
        %vm606 = vmor %vm604, %vm605
        %v607 = vsel %vm606, %v599, %v603
        %v608 = vand.u32 2147483647, %v598
        %vm609 = vcmp.eq.f32.partialorder %v608, 8.507059e+37
        %v610 = vand.u32 %v598, 2147483648
        %v611 = vor.u32 1.1754944e-38, %v610
        %v612 = vsel %vm609, %v611, %v607
        %v613 = vmul.f32 1.0, %v612
        %v614 = vperm.slane %v613, 0
        %v615 = vmul.f32 %v554, %v614
        %v616 = vmul.f32 %v557, %v614
        %v617 = vmul.f32 %v560, %v614
        %v618 = vmul.f32 %v563, %v614
        %619 = vst [vmem:[%s296] sm:$0xff] %v615
        %620 = vst [vmem:[%s296 + $0x8] sm:$0xff] %v616
        %621 = vst [vmem:[%s296 + $0x10] sm:$0xff] %v617
        %622 = vst [vmem:[%s296 + $0x18] sm:$0xff] %v618
        %s623 = sand.u32 %s159, 1
        %s624 = scalar_lea.sflag [#allocation4], %s623
        %s625 = sand.u32 %s159, 1
        %s626 = smul.addr %s625, 32
        %s627 = scalar_lea.vmem [#allocation3], %s626
        // Predicated region
        $region83: #{tpu_custom_call.1} parent=77 // pred_check
          %p628 = pneg %p169
        $region84: #{tpu_custom_call.1} parent=77 // pred_check_branch
          %630 = sbr.rel (%p628) target = $region86
        $region85: #{tpu_custom_call.1} parent=77 // pred_region
          %632 = vsyncadd %s624, 0
          %s633 = smul.addr %s20, 8
          %s634 = scalar_lea.hbm %s6, %s633
          %s635 = sshll.u32 %s627, 4
          %s636 = int_to_ptr.vmem [resolvable:$true] %s635
          %s637 = sshll.u32 %s634, 4
          %s638 = int_to_ptr.hbm [resolvable:$true] %s637
          %643 = dma.vmem_to_hbm [thread:$0]  %s636, 512, %s638, %s624, 128, 256, 8
        $region86: #{tpu_custom_call.1} parent=77 // pred_fallthru
          _
      $region78: #{tpu_custom_call.1} parent=5 // pred_fallthru
        _
      %p644 = scmp.le.s32.totalorder 2, %s15
      // Predicated region
      $region87: #{tpu_custom_call.1} parent=5 // pred_check
        %p645 = pneg %p644
      $region88: #{tpu_custom_call.1} parent=5 // pred_check_branch
        %647 = sbr.rel (%p645) target = $region90
      $region89: #{tpu_custom_call.1} parent=5 // pred_region
        %s648 = ssub.s32 %s15, 2
        // Predicated region
        $region91: #{tpu_custom_call.1} parent=89 // pred_check
          %p649 = pneg %p175
        $region92: #{tpu_custom_call.1} parent=89 // pred_check_branch
          %651 = sbr.rel (%p649) target = $region94
        $region93: #{tpu_custom_call.1} parent=89 // pred_region
          %s652 = sand.u32 %s160, 1
          %s653 = scalar_lea.sflag [#allocation4], %s652
          %s654 = sand.u32 %s160, 1
          %s655 = smul.addr %s654, 32
          %s656 = scalar_lea.vmem [#allocation3], %s655
          %658 = dma.done %s653, 512
        $region94: #{tpu_custom_call.1} parent=89 // pred_fallthru
          _
      $region90: #{tpu_custom_call.1} parent=5 // pred_fallthru
        _
    $region6: #{tpu_custom_call.1} parent=1 // loop_footer
      %s19 = sadd.s32 1, %s15
    $region7: #{tpu_custom_call.1} parent=1 // loop_footer_branch
      %14 = sbr.rel target = $region3
    $region8: #{tpu_custom_call.1} parent=1 // loop_exit
      _
    %659 = vsyncpa [#allocation4], 1
    %s660 = scalar_lea.sflag [#allocation4], 1
    %661 = vsyncpa %s660, 1

</llo_original>
